<compile_context>
chip_gen: v7x
topology: tpu7x:2x2x1
jax: 0.10.0
libtpu: 0.0.40
codegen_flags: <defaults>
</compile_context>

<pallas_src>
import jax
import jax.numpy as jnp
from jax import lax
from jax.experimental import pallas as pl
from jax.experimental.pallas import tpu as pltpu

DIM = 8                 # equation dimension d
HIDDEN = 16             # subnet hidden width
BATCH = 16              # batch size
NUM_TIME_INTERVAL = 8   # N
TOTAL_TIME = 1.0
DELTA_T = TOTAL_TIME / NUM_TIME_INTERVAL
LAMBD = 1.0             # HJB-LQ generator coefficient
SIGMA = jnp.sqrt(2.0)   # HJB-LQ diffusion (used only to simulate x from dw)
BN_EPS = 1e-6

N_BLOCKS = NUM_TIME_INTERVAL + 1       # 8 per-step z subnets + the y_init subnet
FUSED = N_BLOCKS * HIDDEN              # 144: common padded lane width for every fused slab
Y_COL = NUM_TIME_INTERVAL * DIM        # 64: fused column holding the y_init output
OUT_LANES = 128                        # lane-dense merged output width


# ---------------------------------------------------------------------------
# Fused kernel: one block-diagonal 3-layer net over 9 blocks + y / loss reductions
# ---------------------------------------------------------------------------
def _bn_slab(h, g, b):
    """Training-mode BatchNorm over the batch axis of a fused (B, FUSED) slab.

    One-pass variance (independent reductions) — padded all-zero columns stay 0
    because their gamma/beta are packed as 0."""
    mean = jnp.mean(h, axis=0, keepdims=True)
    var = jnp.mean(h * h, axis=0, keepdims=True) - mean * mean
    return g * (h - mean) * lax.rsqrt(var + BN_EPS) + b


def _forward_kernel(x_ref, dw_ref, w_ref, bn_ref, out_ref):
    x = x_ref[...]        # (B, FUSED)  cols t*D..: x_t for block t, block 8 = x_0 (y_init)
    dw = dw_ref[...]      # (B, FUSED)  dw_t in z columns, 0 elsewhere
    wp = w_ref[...]       # (3, FUSED, FUSED) block-diagonal (zero-padded) weights
    bm = bn_ref[...]      # (16, FUSED) BN params + mask rows

    g0, b0 = bm[0:1], bm[1:2]
    g1, b1 = bm[2:3], bm[3:4]
    g2, b2 = bm[4:5], bm[5:6]
    g3, b3 = bm[6:7], bm[7:8]
    z_scale = bm[8:9]     # 1/DIM on z cols, 1 on y0 col, 0 elsewhere  (negative_loss values)
    z_only = bm[9:10]     # 1/DIM on z cols, 0 elsewhere               (z for the recursion)
    y0_hot = bm[10:11]    # 1 on y0 col, 0 elsewhere

    h = _bn_slab(x, g0, b0)
    h = jnp.maximum(_bn_slab(jnp.dot(h, wp[0], preferred_element_type=jnp.float32), g1, b1), 0.0)
    h = jnp.maximum(_bn_slab(jnp.dot(h, wp[1], preferred_element_type=jnp.float32), g2, b2), 0.0)
    out3 = _bn_slab(jnp.dot(h, wp[2], preferred_element_type=jnp.float32), g3, b3)  # (B, FUSED)

    # negative_loss = nl(y0) + sum_t nl(z_t), all columns at once (padded cols are 0)
    nl_vals = out3 * z_scale
    cmin = jnp.minimum(jnp.min(nl_vals, axis=0, keepdims=True), 0.0)
    nl = jnp.sum(cmin * cmin, keepdims=True)                                   # (1, 1)

    # y = y0 + sum_t [ dt*lambd*||z_t||^2 + z_t . dw_t ]   (HJB-LQ generator: f = -lambd||z||^2,
    # independent of t, x, y, so the per-step increments reduce in one lane sum)
    z = out3 * z_only
    contrib = out3 * y0_hot + (DELTA_T * LAMBD) * (z * z) + z * dw
    y = jnp.sum(contrib, axis=1, keepdims=True)                                # (B, 1)

    col = lax.broadcasted_iota(jnp.int32, out_ref.shape, 1)
    out_ref[...] = jnp.where(col == 0, y, jnp.where(col == 1, nl, 0.0))        # lane-dense store


# ---------------------------------------------------------------------------
# Wrapper: layout plumbing + single grid=() pallas_call
# ---------------------------------------------------------------------------
@jax.jit
def nonshared_model_forward(dw, x, w_packed, bn_misc):
    """dw: (B, DIM, N), x: (B, DIM, N+1) (PyTorch layout), packed params from pack_params.

    Returns (y: (B, 1), negative_loss: scalar)."""
    B = dw.shape[0]
    nd = NUM_TIME_INTERVAL * DIM
    # fused, lane-dense inputs: z blocks t=0..N-1, then the y_init block (which sees x[:,:,0])
    x_steps = jnp.transpose(x[:, :, :NUM_TIME_INTERVAL], (0, 2, 1)).reshape(B, nd)
    x_fused = jnp.concatenate([x_steps, x[:, :, 0]], axis=1)                   # (B, 72)
    x_fused = jnp.pad(x_fused, ((0, 0), (0, FUSED - x_fused.shape[1])))        # (B, 144)
    dw_fused = jnp.transpose(dw, (0, 2, 1)).reshape(B, nd)
    dw_fused = jnp.pad(dw_fused, ((0, 0), (0, FUSED - nd)))                    # (B, 144)

    vmem = pl.BlockSpec(memory_space=pltpu.MemorySpace.VMEM)
    out = pl.pallas_call(
        _forward_kernel,
        out_shape=jax.ShapeDtypeStruct((B, OUT_LANES), jnp.float32),
        in_specs=[vmem, vmem, vmem, vmem],
        out_specs=vmem,
    )(x_fused, dw_fused, w_packed, bn_misc)
    return out[:, 0:1], out[0, 1]


# ---------------------------------------------------------------------------
# Parameter packing (done once, wrapper-side)
# ---------------------------------------------------------------------------
def _block_diag(blocks):
    rows = sum(b.shape[0] for b in blocks)
    cols = sum(b.shape[1] for b in blocks)
    out = jnp.zeros((rows, cols), jnp.float32)
    r = c = 0
    for b in blocks:
        out = out.at[r:r + b.shape[0], c:c + b.shape[1]].set(b)
        r += b.shape[0]
        c += b.shape[1]
    return out


def pack_params(y_init_params, subnet_params):
    """Pack 11 y_init params + 11 stacked per-step params into two flat f32 arrays."""
    yg0, yb0, yw1, yg1, yb1, yw2, yg2, yb2, yw3, yg3, yb3 = y_init_params
    sg0, sb0, sw1, sg1, sb1, sw2, sg2, sb2, sw3, sg3, sb3 = subnet_params
    N = NUM_TIME_INTERVAL

    w1 = _block_diag([sw1[t] for t in range(N)] + [yw1])                       # (72, 144)
    w1 = jnp.pad(w1, ((0, FUSED - w1.shape[0]), (0, FUSED - w1.shape[1])))
    w2 = _block_diag([sw2[t] for t in range(N)] + [yw2])                       # (144, 144)
    w3 = _block_diag([sw3[t] for t in range(N)]
                     + [jnp.pad(yw3, ((0, 0), (0, DIM - yw3.shape[1])))])      # (144, 72)
    w3 = jnp.pad(w3, ((0, FUSED - w3.shape[0]), (0, FUSED - w3.shape[1])))
    w_packed = jnp.stack([w1, w2, w3], axis=0)                                 # (3, 144, 144)

    def fuse_vec(stacked, single):
        v = jnp.concatenate([stacked.reshape(-1), single.reshape(-1)]).astype(jnp.float32)
        return jnp.pad(v, (0, FUSED - v.shape[0]))

    lanes = jnp.arange(FUSED)
    z_scale = jnp.where(lanes < Y_COL, 1.0 / DIM,
                        jnp.where(lanes == Y_COL, 1.0, 0.0)).astype(jnp.float32)
    z_only = jnp.where(lanes < Y_COL, 1.0 / DIM, 0.0).astype(jnp.float32)
    y0_hot = (lanes == Y_COL).astype(jnp.float32)

    rows = [fuse_vec(sg0, yg0), fuse_vec(sb0, yb0),
            fuse_vec(sg1, yg1), fuse_vec(sb1, yb1),
            fuse_vec(sg2, yg2), fuse_vec(sb2, yb2),
            fuse_vec(sg3, yg3), fuse_vec(sb3, yb3),
            z_scale, z_only, y0_hot]
    rows += [jnp.zeros((FUSED,), jnp.float32)] * (16 - len(rows))
    bn_misc = jnp.stack(rows, axis=0)                                          # (16, 144)
    return w_packed, bn_misc


# ---------------------------------------------------------------------------
# Deterministic parameter init (PyTorch-style shapes; weights (in, out), no bias)
# ---------------------------------------------------------------------------
def init_subnet_params(key, in_dim, hidden, out_dim):
    ks = jax.random.split(key, 11)

    def gamma(k, d):
        return jax.random.uniform(k, (1, d), minval=0.1, maxval=0.5, dtype=jnp.float32)

    def beta(k, d):
        return 0.1 * jax.random.normal(k, (1, d), dtype=jnp.float32)

    def weight(k, i, o):
        return jax.random.normal(k, (i, o), dtype=jnp.float32) / jnp.sqrt(jnp.float32(i))

    return (gamma(ks[0], in_dim), beta(ks[1], in_dim),
            weight(ks[2], in_dim, hidden), gamma(ks[3], hidden), beta(ks[4], hidden),
            weight(ks[5], hidden, hidden), gamma(ks[6], hidden), beta(ks[7], hidden),
            weight(ks[8], hidden, out_dim), gamma(ks[9], out_dim), beta(ks[10], out_dim))


# ---------------------------------------------------------------------------
# Pure-JAX reference (mirrors the PyTorch forward) for correctness check
# ---------------------------------------------------------------------------
def _batch_norm_ref(x, gamma, beta):
    mean = jnp.mean(x, axis=0, keepdims=True)
    var = jnp.mean((x - mean) ** 2, axis=0, keepdims=True)
    return gamma * (x - mean) * lax.rsqrt(var + BN_EPS) + beta


def _subnet_apply_ref(x, params):
    g0, b0, w1, g1, b1, w2, g2, b2, w3, g3, b3 = params
    h = _batch_norm_ref(x, g0, b0)
    h = jnp.maximum(_batch_norm_ref(jnp.dot(h, w1), g1, b1), 0.0)
    h = jnp.maximum(_batch_norm_ref(jnp.dot(h, w2), g2, b2), 0.0)
    return _batch_norm_ref(jnp.dot(h, w3), g3, b3)


def reference_forward(dw, x, y_init_params, subnet_params):
    y = _subnet_apply_ref(x[:, :, 0], y_init_params)
    nl = jnp.sum(jnp.minimum(jnp.min(y, axis=0, keepdims=True), 0.0) ** 2)
    for t in range(NUM_TIME_INTERVAL):
        params_t = tuple(p[t] for p in subnet_params)
        z = _subnet_apply_ref(x[:, :, t], params_t) / DIM
        nl = nl + jnp.sum(jnp.minimum(jnp.min(z, axis=0, keepdims=True), 0.0) ** 2)
        f = -LAMBD * jnp.sum(z * z, axis=1, keepdims=True)
        y = y - DELTA_T * f + jnp.sum(z * dw[:, :, t], axis=1, keepdims=True)
    return y, nl


if __name__ == "__main__":
    key = jax.random.PRNGKey(0)
    k_dw, k_y, k_sub = jax.random.split(key, 3)

    # Brownian increments (B, D, N) and simulated state path (B, D, N+1), PyTorch layout.
    dw = jnp.sqrt(DELTA_T) * jax.random.normal(
        k_dw, (BATCH, DIM, NUM_TIME_INTERVAL), dtype=jnp.float32)
    x_steps = [jnp.zeros((BATCH, DIM), jnp.float32)]
    for t in range(NUM_TIME_INTERVAL):
        x_steps.append(x_steps[-1] + SIGMA * dw[:, :, t])
    x = jnp.stack(x_steps, axis=2)  # (B, DIM, N+1)

    # y_init subnet (output dim 1) + one subnet per time step (output dim DIM), stacked.
    y_init_params = init_subnet_params(k_y, DIM, HIDDEN, 1)
    sub_keys = jax.random.split(k_sub, NUM_TIME_INTERVAL)
    per_step = [init_subnet_params(k, DIM, HIDDEN, DIM) for k in sub_keys]
    subnet_params = tuple(jnp.stack(ps, axis=0) for ps in zip(*per_step))

    w_packed, bn_misc = pack_params(y_init_params, subnet_params)

    y, neg_loss = nonshared_model_forward(dw, x, w_packed, bn_misc)
    jax.block_until_ready((y, neg_loss))

    y_ref, nl_ref = reference_forward(dw, x, y_init_params, subnet_params)
    assert jnp.allclose(y, y_ref, rtol=1e-4, atol=1e-4), (y, y_ref)
    assert jnp.allclose(neg_loss, nl_ref, rtol=1e-4, atol=1e-4), (neg_loss, nl_ref)

    print("KERNEL_OK")
</pallas_src>

<mosaic_0001>
module attributes {stable_mosaic.version = 11 : i64} {
  func.func @_forward_kernel(%arg0: memref<16x144xf32, #tpu.memory_space<vmem>>, %arg1: memref<16x144xf32, #tpu.memory_space<vmem>>, %arg2: memref<3x144x144xf32, #tpu.memory_space<vmem>>, %arg3: memref<16x144xf32, #tpu.memory_space<vmem>>, %arg4: memref<16x128xf32, #tpu.memory_space<vmem>>) attributes {dimension_semantics = [], scalar_prefetch = 0 : i64, scratch_operands = 0 : i64, tpu.core_type = #tpu.core_type<tc>} {
    %c0 = arith.constant 0 : index
    %c0_0 = arith.constant 0 : index
    %0 = vector.load %arg0[%c0, %c0_0] : memref<16x144xf32, #tpu.memory_space<vmem>>, vector<16x144xf32>
    %c0_1 = arith.constant 0 : index
    %c0_2 = arith.constant 0 : index
    %1 = vector.load %arg1[%c0_1, %c0_2] : memref<16x144xf32, #tpu.memory_space<vmem>>, vector<16x144xf32>
    %c0_3 = arith.constant 0 : index
    %c0_4 = arith.constant 0 : index
    %c0_5 = arith.constant 0 : index
    %2 = vector.load %arg2[%c0_3, %c0_4, %c0_5] : memref<3x144x144xf32, #tpu.memory_space<vmem>>, vector<3x144x144xf32>
    %c0_6 = arith.constant 0 : index
    %c0_7 = arith.constant 0 : index
    %3 = vector.load %arg3[%c0_6, %c0_7] : memref<16x144xf32, #tpu.memory_space<vmem>>, vector<16x144xf32>
    %4 = vector.extract_strided_slice %3 {offsets = [0, 0], sizes = [1, 144], strides = [1, 1]} : vector<16x144xf32> to vector<1x144xf32>
    %5 = vector.extract_strided_slice %3 {offsets = [1, 0], sizes = [1, 144], strides = [1, 1]} : vector<16x144xf32> to vector<1x144xf32>
    %6 = vector.extract_strided_slice %3 {offsets = [2, 0], sizes = [1, 144], strides = [1, 1]} : vector<16x144xf32> to vector<1x144xf32>
    %7 = vector.extract_strided_slice %3 {offsets = [3, 0], sizes = [1, 144], strides = [1, 1]} : vector<16x144xf32> to vector<1x144xf32>
    %8 = vector.extract_strided_slice %3 {offsets = [4, 0], sizes = [1, 144], strides = [1, 1]} : vector<16x144xf32> to vector<1x144xf32>
    %9 = vector.extract_strided_slice %3 {offsets = [5, 0], sizes = [1, 144], strides = [1, 1]} : vector<16x144xf32> to vector<1x144xf32>
    %10 = vector.extract_strided_slice %3 {offsets = [6, 0], sizes = [1, 144], strides = [1, 1]} : vector<16x144xf32> to vector<1x144xf32>
    %11 = vector.extract_strided_slice %3 {offsets = [7, 0], sizes = [1, 144], strides = [1, 1]} : vector<16x144xf32> to vector<1x144xf32>
    %12 = vector.extract_strided_slice %3 {offsets = [8, 0], sizes = [1, 144], strides = [1, 1]} : vector<16x144xf32> to vector<1x144xf32>
    %13 = vector.extract_strided_slice %3 {offsets = [9, 0], sizes = [1, 144], strides = [1, 1]} : vector<16x144xf32> to vector<1x144xf32>
    %14 = vector.extract_strided_slice %3 {offsets = [10, 0], sizes = [1, 144], strides = [1, 1]} : vector<16x144xf32> to vector<1x144xf32>
    %cst = arith.constant dense<0.000000e+00> : vector<144xf32>
    %15 = vector.multi_reduction <add>, %0, %cst [0] : vector<16x144xf32> to vector<144xf32>
    %16 = vector.shape_cast %15 : vector<144xf32> to vector<1x144xf32>
    %cst_8 = arith.constant 1.600000e+01 : f32
    %17 = vector.broadcast %cst_8 : f32 to vector<1x144xf32>
    %18 = arith.divf %16, %17 : vector<1x144xf32>
    %19 = arith.mulf %0, %0 : vector<16x144xf32>
    %cst_9 = arith.constant dense<0.000000e+00> : vector<144xf32>
    %20 = vector.multi_reduction <add>, %19, %cst_9 [0] : vector<16x144xf32> to vector<144xf32>
    %21 = vector.shape_cast %20 : vector<144xf32> to vector<1x144xf32>
    %cst_10 = arith.constant 1.600000e+01 : f32
    %22 = vector.broadcast %cst_10 : f32 to vector<1x144xf32>
    %23 = arith.divf %21, %22 : vector<1x144xf32>
    %24 = arith.mulf %18, %18 : vector<1x144xf32>
    %25 = arith.subf %23, %24 : vector<1x144xf32>
    %26 = vector.broadcast %18 : vector<1x144xf32> to vector<16x144xf32>
    %27 = arith.subf %0, %26 : vector<16x144xf32>
    %28 = vector.broadcast %4 : vector<1x144xf32> to vector<16x144xf32>
    %29 = arith.mulf %28, %27 : vector<16x144xf32>
    %cst_11 = arith.constant 9.99999997E-7 : f32
    %30 = vector.broadcast %cst_11 : f32 to vector<1x144xf32>
    %31 = arith.addf %25, %30 : vector<1x144xf32>
    %32 = math.rsqrt %31 : vector<1x144xf32>
    %33 = vector.broadcast %32 : vector<1x144xf32> to vector<16x144xf32>
    %34 = arith.mulf %29, %33 : vector<16x144xf32>
    %35 = vector.broadcast %5 : vector<1x144xf32> to vector<16x144xf32>
    %36 = arith.addf %34, %35 : vector<16x144xf32>
    %37 = vector.extract_strided_slice %2 {offsets = [0, 0, 0], sizes = [1, 144, 144], strides = [1, 1, 1]} : vector<3x144x144xf32> to vector<1x144x144xf32>
    %38 = vector.shape_cast %37 : vector<1x144x144xf32> to vector<144x144xf32>
    %cst_12 = arith.constant dense<0.000000e+00> : vector<16x144xf32>
    %39 = tpu.matmul %36, %38, %cst_12 {dimension_numbers = #tpu.dot_dimension_numbers<[1], [0], [0], [1], [0, 0, 1, 1], [], []>} : vector<16x144xf32>, vector<144x144xf32>, vector<16x144xf32> -> vector<16x144xf32>
    %cst_13 = arith.constant dense<0.000000e+00> : vector<144xf32>
    %40 = vector.multi_reduction <add>, %39, %cst_13 [0] : vector<16x144xf32> to vector<144xf32>
    %41 = vector.shape_cast %40 : vector<144xf32> to vector<1x144xf32>
    %cst_14 = arith.constant 1.600000e+01 : f32
    %42 = vector.broadcast %cst_14 : f32 to vector<1x144xf32>
    %43 = arith.divf %41, %42 : vector<1x144xf32>
    %44 = arith.mulf %39, %39 : vector<16x144xf32>
    %cst_15 = arith.constant dense<0.000000e+00> : vector<144xf32>
    %45 = vector.multi_reduction <add>, %44, %cst_15 [0] : vector<16x144xf32> to vector<144xf32>
    %46 = vector.shape_cast %45 : vector<144xf32> to vector<1x144xf32>
    %cst_16 = arith.constant 1.600000e+01 : f32
    %47 = vector.broadcast %cst_16 : f32 to vector<1x144xf32>
    %48 = arith.divf %46, %47 : vector<1x144xf32>
    %49 = arith.mulf %43, %43 : vector<1x144xf32>
    %50 = arith.subf %48, %49 : vector<1x144xf32>
    %51 = vector.broadcast %43 : vector<1x144xf32> to vector<16x144xf32>
    %52 = arith.subf %39, %51 : vector<16x144xf32>
    %53 = vector.broadcast %6 : vector<1x144xf32> to vector<16x144xf32>
    %54 = arith.mulf %53, %52 : vector<16x144xf32>
    %cst_17 = arith.constant 9.99999997E-7 : f32
    %55 = vector.broadcast %cst_17 : f32 to vector<1x144xf32>
    %56 = arith.addf %50, %55 : vector<1x144xf32>
    %57 = math.rsqrt %56 : vector<1x144xf32>
    %58 = vector.broadcast %57 : vector<1x144xf32> to vector<16x144xf32>
    %59 = arith.mulf %54, %58 : vector<16x144xf32>
    %60 = vector.broadcast %7 : vector<1x144xf32> to vector<16x144xf32>
    %61 = arith.addf %59, %60 : vector<16x144xf32>
    %cst_18 = arith.constant 0.000000e+00 : f32
    %62 = vector.broadcast %cst_18 : f32 to vector<16x144xf32>
    %63 = arith.maximumf %61, %62 : vector<16x144xf32>
    %64 = vector.extract_strided_slice %2 {offsets = [1, 0, 0], sizes = [1, 144, 144], strides = [1, 1, 1]} : vector<3x144x144xf32> to vector<1x144x144xf32>
    %65 = vector.shape_cast %64 : vector<1x144x144xf32> to vector<144x144xf32>
    %cst_19 = arith.constant dense<0.000000e+00> : vector<16x144xf32>
    %66 = tpu.matmul %63, %65, %cst_19 {dimension_numbers = #tpu.dot_dimension_numbers<[1], [0], [0], [1], [0, 0, 1, 1], [], []>} : vector<16x144xf32>, vector<144x144xf32>, vector<16x144xf32> -> vector<16x144xf32>
    %cst_20 = arith.constant dense<0.000000e+00> : vector<144xf32>
    %67 = vector.multi_reduction <add>, %66, %cst_20 [0] : vector<16x144xf32> to vector<144xf32>
    %68 = vector.shape_cast %67 : vector<144xf32> to vector<1x144xf32>
    %cst_21 = arith.constant 1.600000e+01 : f32
    %69 = vector.broadcast %cst_21 : f32 to vector<1x144xf32>
    %70 = arith.divf %68, %69 : vector<1x144xf32>
    %71 = arith.mulf %66, %66 : vector<16x144xf32>
    %cst_22 = arith.constant dense<0.000000e+00> : vector<144xf32>
    %72 = vector.multi_reduction <add>, %71, %cst_22 [0] : vector<16x144xf32> to vector<144xf32>
    %73 = vector.shape_cast %72 : vector<144xf32> to vector<1x144xf32>
    %cst_23 = arith.constant 1.600000e+01 : f32
    %74 = vector.broadcast %cst_23 : f32 to vector<1x144xf32>
    %75 = arith.divf %73, %74 : vector<1x144xf32>
    %76 = arith.mulf %70, %70 : vector<1x144xf32>
    %77 = arith.subf %75, %76 : vector<1x144xf32>
    %78 = vector.broadcast %70 : vector<1x144xf32> to vector<16x144xf32>
    %79 = arith.subf %66, %78 : vector<16x144xf32>
    %80 = vector.broadcast %8 : vector<1x144xf32> to vector<16x144xf32>
    %81 = arith.mulf %80, %79 : vector<16x144xf32>
    %cst_24 = arith.constant 9.99999997E-7 : f32
    %82 = vector.broadcast %cst_24 : f32 to vector<1x144xf32>
    %83 = arith.addf %77, %82 : vector<1x144xf32>
    %84 = math.rsqrt %83 : vector<1x144xf32>
    %85 = vector.broadcast %84 : vector<1x144xf32> to vector<16x144xf32>
    %86 = arith.mulf %81, %85 : vector<16x144xf32>
    %87 = vector.broadcast %9 : vector<1x144xf32> to vector<16x144xf32>
    %88 = arith.addf %86, %87 : vector<16x144xf32>
    %cst_25 = arith.constant 0.000000e+00 : f32
    %89 = vector.broadcast %cst_25 : f32 to vector<16x144xf32>
    %90 = arith.maximumf %88, %89 : vector<16x144xf32>
    %91 = vector.extract_strided_slice %2 {offsets = [2, 0, 0], sizes = [1, 144, 144], strides = [1, 1, 1]} : vector<3x144x144xf32> to vector<1x144x144xf32>
    %92 = vector.shape_cast %91 : vector<1x144x144xf32> to vector<144x144xf32>
    %cst_26 = arith.constant dense<0.000000e+00> : vector<16x144xf32>
    %93 = tpu.matmul %90, %92, %cst_26 {dimension_numbers = #tpu.dot_dimension_numbers<[1], [0], [0], [1], [0, 0, 1, 1], [], []>} : vector<16x144xf32>, vector<144x144xf32>, vector<16x144xf32> -> vector<16x144xf32>
    %cst_27 = arith.constant dense<0.000000e+00> : vector<144xf32>
    %94 = vector.multi_reduction <add>, %93, %cst_27 [0] : vector<16x144xf32> to vector<144xf32>
    %95 = vector.shape_cast %94 : vector<144xf32> to vector<1x144xf32>
    %cst_28 = arith.constant 1.600000e+01 : f32
    %96 = vector.broadcast %cst_28 : f32 to vector<1x144xf32>
    %97 = arith.divf %95, %96 : vector<1x144xf32>
    %98 = arith.mulf %93, %93 : vector<16x144xf32>
    %cst_29 = arith.constant dense<0.000000e+00> : vector<144xf32>
    %99 = vector.multi_reduction <add>, %98, %cst_29 [0] : vector<16x144xf32> to vector<144xf32>
    %100 = vector.shape_cast %99 : vector<144xf32> to vector<1x144xf32>
    %cst_30 = arith.constant 1.600000e+01 : f32
    %101 = vector.broadcast %cst_30 : f32 to vector<1x144xf32>
    %102 = arith.divf %100, %101 : vector<1x144xf32>
    %103 = arith.mulf %97, %97 : vector<1x144xf32>
    %104 = arith.subf %102, %103 : vector<1x144xf32>
    %105 = vector.broadcast %97 : vector<1x144xf32> to vector<16x144xf32>
    %106 = arith.subf %93, %105 : vector<16x144xf32>
    %107 = vector.broadcast %10 : vector<1x144xf32> to vector<16x144xf32>
    %108 = arith.mulf %107, %106 : vector<16x144xf32>
    %cst_31 = arith.constant 9.99999997E-7 : f32
    %109 = vector.broadcast %cst_31 : f32 to vector<1x144xf32>
    %110 = arith.addf %104, %109 : vector<1x144xf32>
    %111 = math.rsqrt %110 : vector<1x144xf32>
    %112 = vector.broadcast %111 : vector<1x144xf32> to vector<16x144xf32>
    %113 = arith.mulf %108, %112 : vector<16x144xf32>
    %114 = vector.broadcast %11 : vector<1x144xf32> to vector<16x144xf32>
    %115 = arith.addf %113, %114 : vector<16x144xf32>
    %116 = vector.broadcast %12 : vector<1x144xf32> to vector<16x144xf32>
    %117 = arith.mulf %115, %116 : vector<16x144xf32>
    %cst_32 = arith.constant dense<0x7F800000> : vector<144xf32>
    %118 = vector.multi_reduction <minimumf>, %117, %cst_32 [0] : vector<16x144xf32> to vector<144xf32>
    %119 = vector.shape_cast %118 : vector<144xf32> to vector<1x144xf32>
    %cst_33 = arith.constant 0.000000e+00 : f32
    %120 = vector.broadcast %cst_33 : f32 to vector<1x144xf32>
    %121 = arith.minimumf %119, %120 : vector<1x144xf32>
    %122 = arith.mulf %121, %121 : vector<1x144xf32>
    %123 = vector.shape_cast %122 : vector<1x144xf32> to vector<1x1x144xf32>
    %cst_34 = arith.constant dense<0.000000e+00> : vector<1xf32>
    %124 = vector.multi_reduction <add>, %123, %cst_34 [1, 2] : vector<1x1x144xf32> to vector<1xf32>
    %125 = vector.shape_cast %124 : vector<1xf32> to vector<1x1x1xf32>
    %126 = vector.extract %125[0, 0, 0] : f32 from vector<1x1x1xf32>
    %127 = vector.broadcast %126 : f32 to vector<1x1xf32>
    %128 = vector.broadcast %13 : vector<1x144xf32> to vector<16x144xf32>
    %129 = arith.mulf %115, %128 : vector<16x144xf32>
    %130 = vector.broadcast %14 : vector<1x144xf32> to vector<16x144xf32>
    %131 = arith.mulf %115, %130 : vector<16x144xf32>
    %132 = arith.mulf %129, %129 : vector<16x144xf32>
    %cst_35 = arith.constant 1.250000e-01 : f32
    %133 = vector.broadcast %cst_35 : f32 to vector<16x144xf32>
    %134 = arith.mulf %133, %132 : vector<16x144xf32>
    %135 = arith.addf %131, %134 : vector<16x144xf32>
    %136 = arith.mulf %129, %1 : vector<16x144xf32>
    %137 = arith.addf %135, %136 : vector<16x144xf32>
    %cst_36 = arith.constant dense<0.000000e+00> : vector<16xf32>
    %138 = vector.multi_reduction <add>, %137, %cst_36 [1] : vector<16x144xf32> to vector<16xf32>
    %139 = vector.shape_cast %138 : vector<16xf32> to vector<16x1xf32>
    %140 = tpu.iota {dimensions = array<i32: 1>} : vector<16x128xi32>
    %c0_i32 = arith.constant 0 : i32
    %141 = vector.broadcast %c0_i32 : i32 to vector<16x128xi32>
    %142 = arith.cmpi eq, %140, %141 : vector<16x128xi32>
    %c1_i32 = arith.constant 1 : i32
    %143 = vector.broadcast %c1_i32 : i32 to vector<16x128xi32>
    %144 = arith.cmpi eq, %140, %143 : vector<16x128xi32>
    %cst_37 = arith.constant 0.000000e+00 : f32
    %145 = vector.shape_cast %127 : vector<1x1xf32> to vector<1x1xf32>
    %146 = vector.broadcast %145 : vector<1x1xf32> to vector<16x128xf32>
    %147 = vector.broadcast %cst_37 : f32 to vector<16x128xf32>
    %148 = arith.select %144, %146, %147 : vector<16x128xi1>, vector<16x128xf32>
    %149 = vector.shape_cast %139 : vector<16x1xf32> to vector<16x1xf32>
    %150 = vector.broadcast %149 : vector<16x1xf32> to vector<16x128xf32>
    %151 = arith.select %142, %150, %148 : vector<16x128xi1>, vector<16x128xf32>
    %c0_38 = arith.constant 0 : index
    %c0_39 = arith.constant 0 : index
    %152 = vector.load %arg4[%c0_38, %c0_39] : memref<16x128xf32, #tpu.memory_space<vmem>>, vector<16x128xf32>
    tpu.vector_store %arg4[%c0_38, %c0_39], %151 {strides = array<i32>} : memref<16x128xf32, #tpu.memory_space<vmem>>, vector<16x128xf32>,
    return
  }
}

</mosaic_0001>

<llo_original>
// kernel: nonshared_model_forward.1
$region0: #{nonshared_model_forward.1}
  #allocation0 [shape = 'u32[]', space=smem, size = 0x4, offset = 0x4, fixed_abs, tag = 'smem constant byte address 0x4 - core index']
  #allocation1 [shape = 'u32[144,128]{1,0:T(1,128)}', space=vmem, size = 0x12000, scoped, tag = 'internal scratch']
  %s0 = inlined_call_operand.vmem [shape: f32[16,144], index: 0, kind: input, shape index: {}]
  %s1 = inlined_call_operand.vmem [shape: f32[16,144], index: 1, kind: input, shape index: {}]
  %s2 = inlined_call_operand.hbm [shape: f32[3,144,144], index: 2, kind: input, shape index: {}]
  %s3 = inlined_call_operand.vmem [shape: f32[16,144], index: 3, kind: input, shape index: {}]
  %s4 = inlined_call_operand.vmem [shape: f32[16,128], index: 4, kind: output, shape index: {}]
  %s5 = sld [smem:[#allocation0]]
  $region30: #{nonshared_model_forward.1} parent=0
    _
  %s7 = ssub.s32 1, %s5
  %s8 = scalar_select 0, %s7, %s5
  $region1: #{nonshared_model_forward.1} parent=0
    #allocation2 [shape = 'u8[442368]{0}', space=vmem, size = 0x6c000, scoped, tag = 'input window, operand 2, single buffered']
    #allocation3 [shape = 's32[1]{0}', space=sflag, size = 0x4, scoped, tag = 'scoped memory for nonshared_model_forward.1']
    %9 = vsyncpa [#allocation3], 0
    // Predicated region
    $region2: #{nonshared_model_forward.1} parent=1 // pred_check
      _
    $region3: #{nonshared_model_forward.1} parent=1 // pred_check_branch
      %11 = sbr.rel (0) target = $region5
    $region4: #{nonshared_model_forward.1} parent=1 // pred_region
      _
    $region5: #{nonshared_model_forward.1} parent=1 // pred_fallthru
      _
    // Predicated region
    $region6: #{nonshared_model_forward.1} parent=1 // pred_check
      _
    $region7: #{nonshared_model_forward.1} parent=1 // pred_check_branch
      %13 = sbr.rel (0) target = $region9
    $region8: #{nonshared_model_forward.1} parent=1 // pred_region
      _
    $region9: #{nonshared_model_forward.1} parent=1 // pred_fallthru
      _
    // Predicated region
    $region10: #{nonshared_model_forward.1} parent=1 // pred_check
      _
    $region11: #{nonshared_model_forward.1} parent=1 // pred_check_branch
      %15 = sbr.rel (0) target = $region13
    $region12: #{nonshared_model_forward.1} parent=1 // pred_region
      %s17 = ssub.s32 13824, 13824
      %18 = vsyncadd [#allocation3], %s17
      %s19 = sshll.u32 [#allocation2], 4
      %s20 = int_to_ptr.vmem [resolvable:$true] %s19
      %25 = dma.hbm_to_vmem [thread:$0]  %s2, 13824, %s20, [#allocation3], 256, 256, 16
    $region13: #{nonshared_model_forward.1} parent=1 // pred_fallthru
      _
    // Predicated region
    $region14: #{nonshared_model_forward.1} parent=1 // pred_check
      _
    $region15: #{nonshared_model_forward.1} parent=1 // pred_check_branch
      %27 = sbr.rel (0) target = $region17
    $region16: #{nonshared_model_forward.1} parent=1 // pred_region
      _
    $region17: #{nonshared_model_forward.1} parent=1 // pred_fallthru
      _
    // Predicated region
    $region18: #{nonshared_model_forward.1} parent=1 // pred_check
      _
    $region19: #{nonshared_model_forward.1} parent=1 // pred_check_branch
      %29 = sbr.rel (0) target = $region21
    $region20: #{nonshared_model_forward.1} parent=1 // pred_region
      %30 = dma.done [#allocation3], 13824
    $region21: #{nonshared_model_forward.1} parent=1 // pred_fallthru
      _
    %v31 = vld [vmem:[%s0] sm:$0xff]
    %v32 = vld [vmem:[%s0 + $0x8] sm:$0xff]
    %v33 = vld [vmem:[%s0 + $0x10] sm:$0xff]
    %v34 = vld [vmem:[%s0 + $0x18] sm:$0xff]
    %v35 = vld [vmem:[%s1] sm:$0xff]
    %v36 = vld [vmem:[%s1 + $0x8] sm:$0xff]
    %v37 = vld [vmem:[%s1 + $0x10] sm:$0xff]
    %v38 = vld [vmem:[%s1 + $0x18] sm:$0xff]
    %v39 = vld [vmem:[#allocation2] sm:$0xff]
    %v40 = vld [vmem:[#allocation2 + $0x8] sm:$0xff]
    %v41 = vld [vmem:[#allocation2 + $0x10] sm:$0xff]
    %v42 = vld [vmem:[#allocation2 + $0x18] sm:$0xff]
    %v43 = vld [vmem:[#allocation2 + $0x20] sm:$0xff]
    %v44 = vld [vmem:[#allocation2 + $0x28] sm:$0xff]
    %v45 = vld [vmem:[#allocation2 + $0x30] sm:$0xff]
    %v46 = vld [vmem:[#allocation2 + $0x38] sm:$0xff]
    %v47 = vld [vmem:[#allocation2 + $0x40] sm:$0xff]
    %v48 = vld [vmem:[#allocation2 + $0x48] sm:$0xff]
    %v49 = vld [vmem:[#allocation2 + $0x50] sm:$0xff]
    %v50 = vld [vmem:[#allocation2 + $0x58] sm:$0xff]
    %v51 = vld [vmem:[#allocation2 + $0x60] sm:$0xff]
    %v52 = vld [vmem:[#allocation2 + $0x68] sm:$0xff]
    %v53 = vld [vmem:[#allocation2 + $0x70] sm:$0xff]
    %v54 = vld [vmem:[#allocation2 + $0x78] sm:$0xff]
    %v55 = vld [vmem:[#allocation2 + $0x80] sm:$0xff]
    %v56 = vld [vmem:[#allocation2 + $0x88] sm:$0xff]
    %v57 = vld [vmem:[#allocation2 + $0x90] sm:$0xff]
    %v58 = vld [vmem:[#allocation2 + $0x98] sm:$0xff]
    %v59 = vld [vmem:[#allocation2 + $0xa0] sm:$0xff]
    %v60 = vld [vmem:[#allocation2 + $0xa8] sm:$0xff]
    %v61 = vld [vmem:[#allocation2 + $0xb0] sm:$0xff]
    %v62 = vld [vmem:[#allocation2 + $0xb8] sm:$0xff]
    %v63 = vld [vmem:[#allocation2 + $0xc0] sm:$0xff]
    %v64 = vld [vmem:[#allocation2 + $0xc8] sm:$0xff]
    %v65 = vld [vmem:[#allocation2 + $0xd0] sm:$0xff]
    %v66 = vld [vmem:[#allocation2 + $0xd8] sm:$0xff]
    %v67 = vld [vmem:[#allocation2 + $0xe0] sm:$0xff]
    %v68 = vld [vmem:[#allocation2 + $0xe8] sm:$0xff]
    %v69 = vld [vmem:[#allocation2 + $0xf0] sm:$0xff]
    %v70 = vld [vmem:[#allocation2 + $0xf8] sm:$0xff]
    %v71 = vld [vmem:[#allocation2 + $0x100] sm:$0xff]
    %v72 = vld [vmem:[#allocation2 + $0x108] sm:$0xff]
    %v73 = vld [vmem:[#allocation2 + $0x110] sm:$0xff]
    %v74 = vld [vmem:[#allocation2 + $0x118] sm:$0xff]
    %v75 = vld [vmem:[#allocation2 + $0x120] sm:$0xff]
    %v76 = vld [vmem:[#allocation2 + $0x128] sm:$0xff]
    %v77 = vld [vmem:[#allocation2 + $0x130] sm:$0xff]
    %v78 = vld [vmem:[#allocation2 + $0x138] sm:$0xff]
    %v79 = vld [vmem:[#allocation2 + $0x140] sm:$0xff]
    %v80 = vld [vmem:[#allocation2 + $0x148] sm:$0xff]
    %v81 = vld [vmem:[#allocation2 + $0x150] sm:$0xff]
    %v82 = vld [vmem:[#allocation2 + $0x158] sm:$0xff]
    %v83 = vld [vmem:[#allocation2 + $0x160] sm:$0xff]
    %v84 = vld [vmem:[#allocation2 + $0x168] sm:$0xff]
    %v85 = vld [vmem:[#allocation2 + $0x170] sm:$0xff]
    %v86 = vld [vmem:[#allocation2 + $0x178] sm:$0xff]
    %v87 = vld [vmem:[#allocation2 + $0x180] sm:$0xff]
    %v88 = vld [vmem:[#allocation2 + $0x188] sm:$0xff]
    %v89 = vld [vmem:[#allocation2 + $0x190] sm:$0xff]
    %v90 = vld [vmem:[#allocation2 + $0x198] sm:$0xff]
    %v91 = vld [vmem:[#allocation2 + $0x1a0] sm:$0xff]
    %v92 = vld [vmem:[#allocation2 + $0x1a8] sm:$0xff]
    %v93 = vld [vmem:[#allocation2 + $0x1b0] sm:$0xff]
    %v94 = vld [vmem:[#allocation2 + $0x1b8] sm:$0xff]
    %v95 = vld [vmem:[#allocation2 + $0x1c0] sm:$0xff]
    %v96 = vld [vmem:[#allocation2 + $0x1c8] sm:$0xff]
    %v97 = vld [vmem:[#allocation2 + $0x1d0] sm:$0xff]
    %v98 = vld [vmem:[#allocation2 + $0x1d8] sm:$0xff]
    %v99 = vld [vmem:[#allocation2 + $0x1e0] sm:$0xff]
    %v100 = vld [vmem:[#allocation2 + $0x1e8] sm:$0xff]
    %v101 = vld [vmem:[#allocation2 + $0x1f0] sm:$0xff]
    %v102 = vld [vmem:[#allocation2 + $0x1f8] sm:$0xff]
    %v103 = vld [vmem:[#allocation2 + $0x200] sm:$0xff]
    %v104 = vld [vmem:[#allocation2 + $0x208] sm:$0xff]
    %v105 = vld [vmem:[#allocation2 + $0x210] sm:$0xff]
    %v106 = vld [vmem:[#allocation2 + $0x218] sm:$0xff]
    %v107 = vld [vmem:[#allocation2 + $0x220] sm:$0xff]
    %v108 = vld [vmem:[#allocation2 + $0x228] sm:$0xff]
    %v109 = vld [vmem:[#allocation2 + $0x230] sm:$0xff]
    %v110 = vld [vmem:[#allocation2 + $0x238] sm:$0xff]
    %v111 = vld [vmem:[#allocation2 + $0x240] sm:$0xff]
    %v112 = vld [vmem:[#allocation2 + $0x248] sm:$0xff]
    %v113 = vld [vmem:[#allocation2 + $0x250] sm:$0xff]
    %v114 = vld [vmem:[#allocation2 + $0x258] sm:$0xff]
    %v115 = vld [vmem:[#allocation2 + $0x260] sm:$0xff]
    %v116 = vld [vmem:[#allocation2 + $0x268] sm:$0xff]
    %v117 = vld [vmem:[#allocation2 + $0x270] sm:$0xff]
    %v118 = vld [vmem:[#allocation2 + $0x278] sm:$0xff]
    %v119 = vld [vmem:[#allocation2 + $0x280] sm:$0xff]
    %v120 = vld [vmem:[#allocation2 + $0x288] sm:$0xff]
    %v121 = vld [vmem:[#allocation2 + $0x290] sm:$0xff]
    %v122 = vld [vmem:[#allocation2 + $0x298] sm:$0xff]
    %v123 = vld [vmem:[#allocation2 + $0x2a0] sm:$0xff]
    %v124 = vld [vmem:[#allocation2 + $0x2a8] sm:$0xff]
    %v125 = vld [vmem:[#allocation2 + $0x2b0] sm:$0xff]
    %v126 = vld [vmem:[#allocation2 + $0x2b8] sm:$0xff]
    %v127 = vld [vmem:[#allocation2 + $0x2c0] sm:$0xff]
    %v128 = vld [vmem:[#allocation2 + $0x2c8] sm:$0xff]
    %v129 = vld [vmem:[#allocation2 + $0x2d0] sm:$0xff]
    %v130 = vld [vmem:[#allocation2 + $0x2d8] sm:$0xff]
    %v131 = vld [vmem:[#allocation2 + $0x2e0] sm:$0xff]
    %v132 = vld [vmem:[#allocation2 + $0x2e8] sm:$0xff]
    %v133 = vld [vmem:[#allocation2 + $0x2f0] sm:$0xff]
    %v134 = vld [vmem:[#allocation2 + $0x2f8] sm:$0xff]
    %v135 = vld [vmem:[#allocation2 + $0x300] sm:$0xff]
    %v136 = vld [vmem:[#allocation2 + $0x308] sm:$0xff]
    %v137 = vld [vmem:[#allocation2 + $0x310] sm:$0xff]
    %v138 = vld [vmem:[#allocation2 + $0x318] sm:$0xff]
    %v139 = vld [vmem:[#allocation2 + $0x320] sm:$0xff]
    %v140 = vld [vmem:[#allocation2 + $0x328] sm:$0xff]
    %v141 = vld [vmem:[#allocation2 + $0x330] sm:$0xff]
    %v142 = vld [vmem:[#allocation2 + $0x338] sm:$0xff]
    %v143 = vld [vmem:[#allocation2 + $0x340] sm:$0xff]
    %v144 = vld [vmem:[#allocation2 + $0x348] sm:$0xff]
    %v145 = vld [vmem:[#allocation2 + $0x350] sm:$0xff]
    %v146 = vld [vmem:[#allocation2 + $0x358] sm:$0xff]
    %v147 = vld [vmem:[%s3] sm:$0xff]
    %v148 = vld [vmem:[%s3 + $0x8] sm:$0xff]
    %v149 = vld [vmem:[%s3 + $0x10] sm:$0xff]
    %v150 = vld [vmem:[%s3 + $0x18] sm:$0xff]
    %v151 = vadd.f32 %v31, %v33
    %v152 = vrot.slane %v151, 4
    %v153 = vadd.f32 %v151, %v152
    %v154 = vrot.slane %v153, 2
    %v155 = vadd.f32 %v153, %v154
    %v156 = vrot.slane %v155, 1
    %v157 = vadd.f32 %v155, %v156
    %vm158 = vcmask 130048
    %v159 = vsel %vm158, %v32, 0.0
    %v160 = vsel %vm158, %v34, 0.0
    %v161 = vadd.f32 %v159, %v160
    %v162 = vrot.slane %v161, 4
    %v163 = vadd.f32 %v161, %v162
    %v164 = vrot.slane %v163, 2
    %v165 = vadd.f32 %v163, %v164
    %v166 = vrot.slane %v165, 1
    %v167 = vadd.f32 %v165, %v166
    %v168 = vrcp.pop 16.0
    %v169 = vmul.f32 %v157, %v168
    %v170 = vmul.f32 %v167, %v168
    %v171 = vmul.f32 %v31, %v31
    %v172 = vmul.f32 %v32, %v32
    %v173 = vmul.f32 %v33, %v33
    %v174 = vmul.f32 %v34, %v34
    %v175 = vadd.f32 %v171, %v173
    %v176 = vrot.slane %v175, 4
    %v177 = vadd.f32 %v175, %v176
    %v178 = vrot.slane %v177, 2
    %v179 = vadd.f32 %v177, %v178
    %v180 = vrot.slane %v179, 1
    %v181 = vadd.f32 %v179, %v180
    %v182 = vsel %vm158, %v172, 0.0
    %v183 = vsel %vm158, %v174, 0.0
    %v184 = vadd.f32 %v182, %v183
    %v185 = vrot.slane %v184, 4
    %v186 = vadd.f32 %v184, %v185
    %v187 = vrot.slane %v186, 2
    %v188 = vadd.f32 %v186, %v187
    %v189 = vrot.slane %v188, 1
    %v190 = vadd.f32 %v188, %v189
    %v191 = vmul.f32 %v181, %v168
    %v192 = vmul.f32 %v190, %v168
    %v193 = vmul.f32 %v169, %v169
    %v194 = vmul.f32 %v170, %v170
    %v195 = vsub.f32 %v191, %v193
    %v196 = vsub.f32 %v192, %v194
    %v197 = vsub.f32 %v31, %v169
    %v198 = vsub.f32 %v32, %v170
    %v199 = vsub.f32 %v33, %v169
    %v200 = vsub.f32 %v34, %v170
    %v201 = vlaneseq
    %v202 = vshrl.u32 %v201, 7
    %v203 = vsub.s32 0, %v202
    %v204 = vrot.slane %v147, %v203
    %v205 = vlaneseq
    %v206 = vshrl.u32 %v205, 7
    %v207 = vsub.s32 0, %v206
    %v208 = vrot.slane %v148, %v207
    %v209 = vmul.f32 %v204, %v197
    %v210 = vmul.f32 %v208, %v198
    %v211 = vmul.f32 %v204, %v199
    %v212 = vmul.f32 %v208, %v200
    %v213 = vadd.f32 %v195, 1e-06
    %v214 = vadd.f32 %v196, 1e-06
    %v215 = vrsqrt.pop %v213
    %v216 = vrsqrt.pop %v214
    %v217 = vmul.f32 %v209, %v215
    %v218 = vmul.f32 %v210, %v216
    %v219 = vmul.f32 %v211, %v215
    %v220 = vmul.f32 %v212, %v216
    %v221 = vlaneseq
    %v222 = vshrl.u32 %v221, 7
    %v223 = vsub.s32 1, %v222
    %v224 = vrot.slane %v147, %v223
    %v225 = vlaneseq
    %v226 = vshrl.u32 %v225, 7
    %v227 = vsub.s32 1, %v226
    %v228 = vrot.slane %v148, %v227
    %v229 = vadd.f32 %v217, %v224
    %v230 = vadd.f32 %v218, %v228
    %v231 = vadd.f32 %v219, %v224
    %v232 = vadd.f32 %v220, %v228
    %v234 = vsel %vm158, %v230, 0
    %v237 = vsel %vm158, %v232, 0
    %239 = vmatprep.subr.mxu0 %v40
    %240 = vmatpush1.msra.mxu0 %v39
    %241 = vmatprep.subr.mxu0 %v42
    %242 = vmatpush1.msra.mxu0 %v41
    %243 = vmatprep.subr.mxu0 %v44
    %244 = vmatpush1.msra.mxu0 %v43
    %245 = vmatprep.subr.mxu0 %v46
    %246 = vmatpush1.msra.mxu0 %v45
    %247 = vmatprep.subr.mxu0 %v48
    %248 = vmatpush1.msra.mxu0 %v47
    %249 = vmatprep.subr.mxu0 %v50
    %250 = vmatpush1.msra.mxu0 %v49
    %251 = vmatprep.subr.mxu0 %v52
    %252 = vmatpush1.msra.mxu0 %v51
    %253 = vmatprep.subr.mxu0 %v54
    %254 = vmatpush1.msra.mxu0 %v53
    %255 = vmatprep.subr.mxu0 %v56
    %256 = vmatpush1.msra.mxu0 %v55
    %257 = vmatprep.subr.mxu0 %v58
    %258 = vmatpush1.msra.mxu0 %v57
    %259 = vmatprep.subr.mxu0 %v60
    %260 = vmatpush1.msra.mxu0 %v59
    %261 = vmatprep.subr.mxu0 %v62
    %262 = vmatpush1.msra.mxu0 %v61
    %263 = vmatprep.subr.mxu0 %v64
    %264 = vmatpush1.msra.mxu0 %v63
    %265 = vmatprep.subr.mxu0 %v66
    %266 = vmatpush1.msra.mxu0 %v65
    %267 = vmatprep.subr.mxu0 %v68
    %268 = vmatpush1.msra.mxu0 %v67
    %269 = vmatprep.subr.mxu0 %v70
    %270 = vmatpush1.msra.mxu0 %v69
    %271 = vmatprep.subr.mxu0 %v72
    %272 = vmatpush1.msra.mxu0 %v71
    %273 = vmatprep.subr.mxu0 %v74
    %274 = vmatpush1.msra.mxu0 %v73
    %275 = vmatprep.subr.mxu0 0.0
    %276 = vmatpush1.msra.mxu0 0.0
    %277 = vmatprep.subr.mxu0 0.0
    %278 = vmatpush1.msra.mxu0 0.0
    %279 = vmatprep.subr.mxu0 0.0
    %280 = vmatpush1.msra.mxu0 0.0
    %281 = vmatprep.subr.mxu0 0.0
    %282 = vmatpush1.msra.mxu0 0.0
    %283 = vmatprep.subr.mxu0 0.0
    %284 = vmatpush1.msra.mxu0 0.0
    %285 = vmatprep.subr.mxu0 0.0
    %286 = vmatpush1.msra.mxu0 0.0
    %287 = vmatprep.subr.mxu0 0.0
    %288 = vmatpush1.msra.mxu0 0.0
    %289 = vmatprep.subr.mxu0 0.0
    %290 = vmatpush1.msra.mxu0 0.0
    %291 = vmatprep.subr.mxu0 0.0
    %292 = vmatpush1.msra.mxu0 0.0
    %293 = vmatprep.subr.mxu0 0.0
    %294 = vmatpush1.msra.mxu0 0.0
    %295 = vmatprep.subr.mxu0 0.0
    %296 = vmatpush1.msra.mxu0 0.0
    %297 = vmatprep.subr.mxu0 0.0
    %298 = vmatpush1.msra.mxu0 0.0
    %299 = vmatprep.subr.mxu0 0.0
    %300 = vmatpush1.msra.mxu0 0.0
    %301 = vmatprep.subr.mxu0 0.0
    %302 = vmatpush1.msra.mxu0 0.0
    %303 = vmatprep.mubr.f32.mxu0 %v234
    %304 = vmatmul.mubr.f32.gmra.mrb[0].mxu0 %v229
    %v305 = vpop.f32.mrb[0].mxu0
    %v306 = vadd.f32 0.0, %v305
    %v307 = vpop.f32.mrb[0].mxu0
    %v308 = vadd.f32 0.0, %v307
    %309 = vmatprep.mubr.f32.mxu0 %v237
    %310 = vmatmul.mubr.f32.gmra.mrb[0].mxu0 %v231
    %v311 = vpop.f32.mrb[0].mxu0
    %v312 = vadd.f32 0.0, %v311
    %v313 = vpop.f32.mrb[0].mxu0
    %v314 = vadd.f32 0.0, %v313
    %315 = vdwg.mxu0
    %v316 = vadd.f32 %v306, %v312
    %v317 = vrot.slane %v316, 4
    %v318 = vadd.f32 %v316, %v317
    %v319 = vrot.slane %v318, 2
    %v320 = vadd.f32 %v318, %v319
    %v321 = vrot.slane %v320, 1
    %v322 = vadd.f32 %v320, %v321
    %v323 = vsel %vm158, %v308, 0.0
    %v324 = vsel %vm158, %v314, 0.0
    %v325 = vadd.f32 %v323, %v324
    %v326 = vrot.slane %v325, 4
    %v327 = vadd.f32 %v325, %v326
    %v328 = vrot.slane %v327, 2
    %v329 = vadd.f32 %v327, %v328
    %v330 = vrot.slane %v329, 1
    %v331 = vadd.f32 %v329, %v330
    %v332 = vmul.f32 %v322, %v168
    %v333 = vmul.f32 %v331, %v168
    %v334 = vmul.f32 %v306, %v306
    %v335 = vmul.f32 %v308, %v308
    %v336 = vmul.f32 %v312, %v312
    %v337 = vmul.f32 %v314, %v314
    %v338 = vadd.f32 %v334, %v336
    %v339 = vrot.slane %v338, 4
    %v340 = vadd.f32 %v338, %v339
    %v341 = vrot.slane %v340, 2
    %v342 = vadd.f32 %v340, %v341
    %v343 = vrot.slane %v342, 1
    %v344 = vadd.f32 %v342, %v343
    %v345 = vsel %vm158, %v335, 0.0
    %v346 = vsel %vm158, %v337, 0.0
    %v347 = vadd.f32 %v345, %v346
    %v348 = vrot.slane %v347, 4
    %v349 = vadd.f32 %v347, %v348
    %v350 = vrot.slane %v349, 2
    %v351 = vadd.f32 %v349, %v350
    %v352 = vrot.slane %v351, 1
    %v353 = vadd.f32 %v351, %v352
    %v354 = vmul.f32 %v344, %v168
    %v355 = vmul.f32 %v353, %v168
    %v356 = vmul.f32 %v332, %v332
    %v357 = vmul.f32 %v333, %v333
    %v358 = vsub.f32 %v354, %v356
    %v359 = vsub.f32 %v355, %v357
    %v360 = vsub.f32 %v306, %v332
    %v361 = vsub.f32 %v308, %v333
    %v362 = vsub.f32 %v312, %v332
    %v363 = vsub.f32 %v314, %v333
    %v364 = vlaneseq
    %v365 = vshrl.u32 %v364, 7
    %v366 = vsub.s32 2, %v365
    %v367 = vrot.slane %v147, %v366
    %v368 = vlaneseq
    %v369 = vshrl.u32 %v368, 7
    %v370 = vsub.s32 2, %v369
    %v371 = vrot.slane %v148, %v370
    %v372 = vmul.f32 %v367, %v360
    %v373 = vmul.f32 %v371, %v361
    %v374 = vmul.f32 %v367, %v362
    %v375 = vmul.f32 %v371, %v363
    %v376 = vadd.f32 %v358, 1e-06
    %v377 = vadd.f32 %v359, 1e-06
    %v378 = vrsqrt.pop %v376
    %v379 = vrsqrt.pop %v377
    %v380 = vmul.f32 %v372, %v378
    %v381 = vmul.f32 %v373, %v379
    %v382 = vmul.f32 %v374, %v378
    %v383 = vmul.f32 %v375, %v379
    %v384 = vlaneseq
    %v385 = vshrl.u32 %v384, 7
    %v386 = vsub.s32 3, %v385
    %v387 = vrot.slane %v147, %v386
    %v388 = vlaneseq
    %v389 = vshrl.u32 %v388, 7
    %v390 = vsub.s32 3, %v389
    %v391 = vrot.slane %v148, %v390
    %v392 = vadd.f32 %v380, %v387
    %v393 = vadd.f32 %v381, %v391
    %v394 = vadd.f32 %v382, %v387
    %v395 = vadd.f32 %v383, %v391
    %v396 = vmax.f32 %v392, 0.0
    %v397 = vmax.f32 %v393, 0.0
    %v398 = vmax.f32 %v394, 0.0
    %v399 = vmax.f32 %v395, 0.0
    %v401 = vsel %vm158, %v397, 0
    %v404 = vsel %vm158, %v399, 0
    %406 = vmatprep.subr.mxu0 %v76
    %407 = vmatpush1.msra.mxu0 %v75
    %408 = vmatprep.subr.mxu0 %v78
    %409 = vmatpush1.msra.mxu0 %v77
    %410 = vmatprep.subr.mxu0 %v80
    %411 = vmatpush1.msra.mxu0 %v79
    %412 = vmatprep.subr.mxu0 %v82
    %413 = vmatpush1.msra.mxu0 %v81
    %414 = vmatprep.subr.mxu0 %v84
    %415 = vmatpush1.msra.mxu0 %v83
    %416 = vmatprep.subr.mxu0 %v86
    %417 = vmatpush1.msra.mxu0 %v85
    %418 = vmatprep.subr.mxu0 %v88
    %419 = vmatpush1.msra.mxu0 %v87
    %420 = vmatprep.subr.mxu0 %v90
    %421 = vmatpush1.msra.mxu0 %v89
    %422 = vmatprep.subr.mxu0 %v92
    %423 = vmatpush1.msra.mxu0 %v91
    %424 = vmatprep.subr.mxu0 %v94
    %425 = vmatpush1.msra.mxu0 %v93
    %426 = vmatprep.subr.mxu0 %v96
    %427 = vmatpush1.msra.mxu0 %v95
    %428 = vmatprep.subr.mxu0 %v98
    %429 = vmatpush1.msra.mxu0 %v97
    %430 = vmatprep.subr.mxu0 %v100
    %431 = vmatpush1.msra.mxu0 %v99
    %432 = vmatprep.subr.mxu0 %v102
    %433 = vmatpush1.msra.mxu0 %v101
    %434 = vmatprep.subr.mxu0 %v104
    %435 = vmatpush1.msra.mxu0 %v103
    %436 = vmatprep.subr.mxu0 %v106
    %437 = vmatpush1.msra.mxu0 %v105
    %438 = vmatprep.subr.mxu0 %v108
    %439 = vmatpush1.msra.mxu0 %v107
    %440 = vmatprep.subr.mxu0 %v110
    %441 = vmatpush1.msra.mxu0 %v109
    %442 = vmatprep.subr.mxu0 0.0
    %443 = vmatpush1.msra.mxu0 0.0
    %444 = vmatprep.subr.mxu0 0.0
    %445 = vmatpush1.msra.mxu0 0.0
    %446 = vmatprep.subr.mxu0 0.0
    %447 = vmatpush1.msra.mxu0 0.0
    %448 = vmatprep.subr.mxu0 0.0
    %449 = vmatpush1.msra.mxu0 0.0
    %450 = vmatprep.subr.mxu0 0.0
    %451 = vmatpush1.msra.mxu0 0.0
    %452 = vmatprep.subr.mxu0 0.0
    %453 = vmatpush1.msra.mxu0 0.0
    %454 = vmatprep.subr.mxu0 0.0
    %455 = vmatpush1.msra.mxu0 0.0
    %456 = vmatprep.subr.mxu0 0.0
    %457 = vmatpush1.msra.mxu0 0.0
    %458 = vmatprep.subr.mxu0 0.0
    %459 = vmatpush1.msra.mxu0 0.0
    %460 = vmatprep.subr.mxu0 0.0
    %461 = vmatpush1.msra.mxu0 0.0
    %462 = vmatprep.subr.mxu0 0.0
    %463 = vmatpush1.msra.mxu0 0.0
    %464 = vmatprep.subr.mxu0 0.0
    %465 = vmatpush1.msra.mxu0 0.0
    %466 = vmatprep.subr.mxu0 0.0
    %467 = vmatpush1.msra.mxu0 0.0
    %468 = vmatprep.subr.mxu0 0.0
    %469 = vmatpush1.msra.mxu0 0.0
    %470 = vmatprep.mubr.f32.mxu0 %v401
    %471 = vmatmul.mubr.f32.gmra.mrb[0].mxu0 %v396
    %v472 = vpop.f32.mrb[0].mxu0
    %v473 = vadd.f32 0.0, %v472
    %v474 = vpop.f32.mrb[0].mxu0
    %v475 = vadd.f32 0.0, %v474
    %476 = vmatprep.mubr.f32.mxu0 %v404
    %477 = vmatmul.mubr.f32.gmra.mrb[0].mxu0 %v398
    %v478 = vpop.f32.mrb[0].mxu0
    %v479 = vadd.f32 0.0, %v478
    %v480 = vpop.f32.mrb[0].mxu0
    %v481 = vadd.f32 0.0, %v480
    %482 = vdwg.mxu0
    %v483 = vadd.f32 %v473, %v479
    %v484 = vrot.slane %v483, 4
    %v485 = vadd.f32 %v483, %v484
    %v486 = vrot.slane %v485, 2
    %v487 = vadd.f32 %v485, %v486
    %v488 = vrot.slane %v487, 1
    %v489 = vadd.f32 %v487, %v488
    %v490 = vsel %vm158, %v475, 0.0
    %v491 = vsel %vm158, %v481, 0.0
    %v492 = vadd.f32 %v490, %v491
    %v493 = vrot.slane %v492, 4
    %v494 = vadd.f32 %v492, %v493
    %v495 = vrot.slane %v494, 2
    %v496 = vadd.f32 %v494, %v495
    %v497 = vrot.slane %v496, 1
    %v498 = vadd.f32 %v496, %v497
    %v499 = vmul.f32 %v489, %v168
    %v500 = vmul.f32 %v498, %v168
    %v501 = vmul.f32 %v473, %v473
    %v502 = vmul.f32 %v475, %v475
    %v503 = vmul.f32 %v479, %v479
    %v504 = vmul.f32 %v481, %v481
    %v505 = vadd.f32 %v501, %v503
    %v506 = vrot.slane %v505, 4
    %v507 = vadd.f32 %v505, %v506
    %v508 = vrot.slane %v507, 2
    %v509 = vadd.f32 %v507, %v508
    %v510 = vrot.slane %v509, 1
    %v511 = vadd.f32 %v509, %v510
    %v512 = vsel %vm158, %v502, 0.0
    %v513 = vsel %vm158, %v504, 0.0
    %v514 = vadd.f32 %v512, %v513
    %v515 = vrot.slane %v514, 4
    %v516 = vadd.f32 %v514, %v515
    %v517 = vrot.slane %v516, 2
    %v518 = vadd.f32 %v516, %v517
    %v519 = vrot.slane %v518, 1
    %v520 = vadd.f32 %v518, %v519
    %v521 = vmul.f32 %v511, %v168
    %v522 = vmul.f32 %v520, %v168
    %v523 = vmul.f32 %v499, %v499
    %v524 = vmul.f32 %v500, %v500
    %v525 = vsub.f32 %v521, %v523
    %v526 = vsub.f32 %v522, %v524
    %v527 = vsub.f32 %v473, %v499
    %v528 = vsub.f32 %v475, %v500
    %v529 = vsub.f32 %v479, %v499
    %v530 = vsub.f32 %v481, %v500
    %v531 = vlaneseq
    %v532 = vshrl.u32 %v531, 7
    %v533 = vsub.s32 4, %v532
    %v534 = vrot.slane %v147, %v533
    %v535 = vlaneseq
    %v536 = vshrl.u32 %v535, 7
    %v537 = vsub.s32 4, %v536
    %v538 = vrot.slane %v148, %v537
    %v539 = vmul.f32 %v534, %v527
    %v540 = vmul.f32 %v538, %v528
    %v541 = vmul.f32 %v534, %v529
    %v542 = vmul.f32 %v538, %v530
    %v543 = vadd.f32 %v525, 1e-06
    %v544 = vadd.f32 %v526, 1e-06
    %v545 = vrsqrt.pop %v543
    %v546 = vrsqrt.pop %v544
    %v547 = vmul.f32 %v539, %v545
    %v548 = vmul.f32 %v540, %v546
    %v549 = vmul.f32 %v541, %v545
    %v550 = vmul.f32 %v542, %v546
    %v551 = vlaneseq
    %v552 = vshrl.u32 %v551, 7
    %v553 = vsub.s32 5, %v552
    %v554 = vrot.slane %v147, %v553
    %v555 = vlaneseq
    %v556 = vshrl.u32 %v555, 7
    %v557 = vsub.s32 5, %v556
    %v558 = vrot.slane %v148, %v557
    %v559 = vadd.f32 %v547, %v554
    %v560 = vadd.f32 %v548, %v558
    %v561 = vadd.f32 %v549, %v554
    %v562 = vadd.f32 %v550, %v558
    %v563 = vmax.f32 %v559, 0.0
    %v564 = vmax.f32 %v560, 0.0
    %v565 = vmax.f32 %v561, 0.0
    %v566 = vmax.f32 %v562, 0.0
    %v568 = vsel %vm158, %v564, 0
    %v571 = vsel %vm158, %v566, 0
    %573 = vmatprep.subr.mxu0 %v112
    %574 = vmatpush1.msra.mxu0 %v111
    %575 = vmatprep.subr.mxu0 %v114
    %576 = vmatpush1.msra.mxu0 %v113
    %577 = vmatprep.subr.mxu0 %v116
    %578 = vmatpush1.msra.mxu0 %v115
    %579 = vmatprep.subr.mxu0 %v118
    %580 = vmatpush1.msra.mxu0 %v117
    %581 = vmatprep.subr.mxu0 %v120
    %582 = vmatpush1.msra.mxu0 %v119
    %583 = vmatprep.subr.mxu0 %v122
    %584 = vmatpush1.msra.mxu0 %v121
    %585 = vmatprep.subr.mxu0 %v124
    %586 = vmatpush1.msra.mxu0 %v123
    %587 = vmatprep.subr.mxu0 %v126
    %588 = vmatpush1.msra.mxu0 %v125
    %589 = vmatprep.subr.mxu0 %v128
    %590 = vmatpush1.msra.mxu0 %v127
    %591 = vmatprep.subr.mxu0 %v130
    %592 = vmatpush1.msra.mxu0 %v129
    %593 = vmatprep.subr.mxu0 %v132
    %594 = vmatpush1.msra.mxu0 %v131
    %595 = vmatprep.subr.mxu0 %v134
    %596 = vmatpush1.msra.mxu0 %v133
    %597 = vmatprep.subr.mxu0 %v136
    %598 = vmatpush1.msra.mxu0 %v135
    %599 = vmatprep.subr.mxu0 %v138
    %600 = vmatpush1.msra.mxu0 %v137
    %601 = vmatprep.subr.mxu0 %v140
    %602 = vmatpush1.msra.mxu0 %v139
    %603 = vmatprep.subr.mxu0 %v142
    %604 = vmatpush1.msra.mxu0 %v141
    %605 = vmatprep.subr.mxu0 %v144
    %606 = vmatpush1.msra.mxu0 %v143
    %607 = vmatprep.subr.mxu0 %v146
    %608 = vmatpush1.msra.mxu0 %v145
    %609 = vmatprep.subr.mxu0 0.0
    %610 = vmatpush1.msra.mxu0 0.0
    %611 = vmatprep.subr.mxu0 0.0
    %612 = vmatpush1.msra.mxu0 0.0
    %613 = vmatprep.subr.mxu0 0.0
    %614 = vmatpush1.msra.mxu0 0.0
    %615 = vmatprep.subr.mxu0 0.0
    %616 = vmatpush1.msra.mxu0 0.0
    %617 = vmatprep.subr.mxu0 0.0
    %618 = vmatpush1.msra.mxu0 0.0
    %619 = vmatprep.subr.mxu0 0.0
    %620 = vmatpush1.msra.mxu0 0.0
    %621 = vmatprep.subr.mxu0 0.0
    %622 = vmatpush1.msra.mxu0 0.0
    %623 = vmatprep.subr.mxu0 0.0
    %624 = vmatpush1.msra.mxu0 0.0
    %625 = vmatprep.subr.mxu0 0.0
    %626 = vmatpush1.msra.mxu0 0.0
    %627 = vmatprep.subr.mxu0 0.0
    %628 = vmatpush1.msra.mxu0 0.0
    %629 = vmatprep.subr.mxu0 0.0
    %630 = vmatpush1.msra.mxu0 0.0
    %631 = vmatprep.subr.mxu0 0.0
    %632 = vmatpush1.msra.mxu0 0.0
    %633 = vmatprep.subr.mxu0 0.0
    %634 = vmatpush1.msra.mxu0 0.0
    %635 = vmatprep.subr.mxu0 0.0
    %636 = vmatpush1.msra.mxu0 0.0
    %637 = vmatprep.mubr.f32.mxu0 %v568
    %638 = vmatmul.mubr.f32.gmra.mrb[0].mxu0 %v563
    %v639 = vpop.f32.mrb[0].mxu0
    %v640 = vadd.f32 0.0, %v639
    %v641 = vpop.f32.mrb[0].mxu0
    %v642 = vadd.f32 0.0, %v641
    %643 = vmatprep.mubr.f32.mxu0 %v571
    %644 = vmatmul.mubr.f32.gmra.mrb[0].mxu0 %v565
    %v645 = vpop.f32.mrb[0].mxu0
    %v646 = vadd.f32 0.0, %v645
    %v647 = vpop.f32.mrb[0].mxu0
    %v648 = vadd.f32 0.0, %v647
    %649 = vdwg.mxu0
    %v650 = vadd.f32 %v640, %v646
    %v651 = vrot.slane %v650, 4
    %v652 = vadd.f32 %v650, %v651
    %v653 = vrot.slane %v652, 2
    %v654 = vadd.f32 %v652, %v653
    %v655 = vrot.slane %v654, 1
    %v656 = vadd.f32 %v654, %v655
    %v657 = vsel %vm158, %v642, 0.0
    %v658 = vsel %vm158, %v648, 0.0
    %v659 = vadd.f32 %v657, %v658
    %v660 = vrot.slane %v659, 4
    %v661 = vadd.f32 %v659, %v660
    %v662 = vrot.slane %v661, 2
    %v663 = vadd.f32 %v661, %v662
    %v664 = vrot.slane %v663, 1
    %v665 = vadd.f32 %v663, %v664
    %v666 = vmul.f32 %v656, %v168
    %v667 = vmul.f32 %v665, %v168
    %v668 = vmul.f32 %v640, %v640
    %v669 = vmul.f32 %v642, %v642
    %v670 = vmul.f32 %v646, %v646
    %v671 = vmul.f32 %v648, %v648
    %v672 = vadd.f32 %v668, %v670
    %v673 = vrot.slane %v672, 4
    %v674 = vadd.f32 %v672, %v673
    %v675 = vrot.slane %v674, 2
    %v676 = vadd.f32 %v674, %v675
    %v677 = vrot.slane %v676, 1
    %v678 = vadd.f32 %v676, %v677
    %v679 = vsel %vm158, %v669, 0.0
    %v680 = vsel %vm158, %v671, 0.0
    %v681 = vadd.f32 %v679, %v680
    %v682 = vrot.slane %v681, 4
    %v683 = vadd.f32 %v681, %v682
    %v684 = vrot.slane %v683, 2
    %v685 = vadd.f32 %v683, %v684
    %v686 = vrot.slane %v685, 1
    %v687 = vadd.f32 %v685, %v686
    %v688 = vmul.f32 %v678, %v168
    %v689 = vmul.f32 %v687, %v168
    %v690 = vmul.f32 %v666, %v666
    %v691 = vmul.f32 %v667, %v667
    %v692 = vsub.f32 %v688, %v690
    %v693 = vsub.f32 %v689, %v691
    %v694 = vsub.f32 %v640, %v666
    %v695 = vsub.f32 %v642, %v667
    %v696 = vsub.f32 %v646, %v666
    %v697 = vsub.f32 %v648, %v667
    %v698 = vlaneseq
    %v699 = vshrl.u32 %v698, 7
    %v700 = vsub.s32 6, %v699
    %v701 = vrot.slane %v147, %v700
    %v702 = vlaneseq
    %v703 = vshrl.u32 %v702, 7
    %v704 = vsub.s32 6, %v703
    %v705 = vrot.slane %v148, %v704
    %v706 = vmul.f32 %v701, %v694
    %v707 = vmul.f32 %v705, %v695
    %v708 = vmul.f32 %v701, %v696
    %v709 = vmul.f32 %v705, %v697
    %v710 = vadd.f32 %v692, 1e-06
    %v711 = vadd.f32 %v693, 1e-06
    %v712 = vrsqrt.pop %v710
    %v713 = vrsqrt.pop %v711
    %v714 = vmul.f32 %v706, %v712
    %v715 = vmul.f32 %v707, %v713
    %v716 = vmul.f32 %v708, %v712
    %v717 = vmul.f32 %v709, %v713
    %v718 = vlaneseq
    %v719 = vshrl.u32 %v718, 7
    %v720 = vsub.s32 7, %v719
    %v721 = vrot.slane %v147, %v720
    %v722 = vlaneseq
    %v723 = vshrl.u32 %v722, 7
    %v724 = vsub.s32 7, %v723
    %v725 = vrot.slane %v148, %v724
    %v726 = vadd.f32 %v714, %v721
    %v727 = vadd.f32 %v715, %v725
    %v728 = vadd.f32 %v716, %v721
    %v729 = vadd.f32 %v717, %v725
    %v730 = vlaneseq
    %v731 = vshrl.u32 %v730, 7
    %v732 = vsub.s32 0, %v731
    %v733 = vrot.slane %v149, %v732
    %v734 = vlaneseq
    %v735 = vshrl.u32 %v734, 7
    %v736 = vsub.s32 0, %v735
    %v737 = vrot.slane %v150, %v736
    %v738 = vmul.f32 %v726, %v733
    %v739 = vmul.f32 %v727, %v737
    %v740 = vmul.f32 %v728, %v733
    %v741 = vmul.f32 %v729, %v737
    %v742 = vmin.f32 %v738, %v740
    %v743 = vrot.slane %v742, 4
    %v744 = vmin.f32 %v742, %v743
    %v745 = vrot.slane %v744, 2
    %v746 = vmin.f32 %v744, %v745
    %v747 = vrot.slane %v746, 1
    %v748 = vmin.f32 %v746, %v747
    %v749 = vsel %vm158, %v739, inf
    %v750 = vsel %vm158, %v741, inf
    %v751 = vmin.f32 %v749, %v750
    %v752 = vrot.slane %v751, 4
    %v753 = vmin.f32 %v751, %v752
    %v754 = vrot.slane %v753, 2
    %v755 = vmin.f32 %v753, %v754
    %v756 = vrot.slane %v755, 1
    %v757 = vmin.f32 %v755, %v756
    %v758 = vmin.f32 %v748, 0.0
    %v759 = vmin.f32 %v757, 0.0
    %v760 = vmul.f32 %v758, %v758
    %v761 = vmul.f32 %v759, %v759
    %vm762 = vcmask 1040384
    %v763 = vsel %vm762, %v760, 0.0
    %vm764 = vcmask 122880
    %v765 = vsel %vm764, %v761, 0.0
    %v766 = vadd.f32 %v763, %v765
    %767 = vadd.xlane.f32.xlu0 %v766
    %v768 = vpop.xlane.xlu0 %767
    %v769 = vrot.slane %v768, 4
    %v770 = vadd.f32 %v768, %v769
    %v771 = vrot.slane %v770, 2
    %v772 = vadd.f32 %v770, %v771
    %v773 = vrot.slane %v772, 1
    %v774 = vadd.f32 %v772, %v773
    %s775 = vtos %v774
    %v776 = vlaneseq
    %v777 = vshrl.u32 %v776, 7
    %v778 = vsub.s32 1, %v777
    %v779 = vrot.slane %v149, %v778
    %v780 = vlaneseq
    %v781 = vshrl.u32 %v780, 7
    %v782 = vsub.s32 1, %v781
    %v783 = vrot.slane %v150, %v782
    %v784 = vmul.f32 %v726, %v779
    %v785 = vmul.f32 %v727, %v783
    %v786 = vmul.f32 %v728, %v779
    %v787 = vmul.f32 %v729, %v783
    %v788 = vlaneseq
    %v789 = vshrl.u32 %v788, 7
    %v790 = vsub.s32 2, %v789
    %v791 = vrot.slane %v149, %v790
    %v792 = vlaneseq
    %v793 = vshrl.u32 %v792, 7
    %v794 = vsub.s32 2, %v793
    %v795 = vrot.slane %v150, %v794
    %v796 = vmul.f32 %v726, %v791
    %v797 = vmul.f32 %v727, %v795
    %v798 = vmul.f32 %v728, %v791
    %v799 = vmul.f32 %v729, %v795
    %v800 = vmul.f32 %v784, %v784
    %v801 = vmul.f32 %v785, %v785
    %v802 = vmul.f32 %v786, %v786
    %v803 = vmul.f32 %v787, %v787
    %v804 = vmul.f32 %v800, 0.125
    %v805 = vmul.f32 %v801, 0.125
    %v806 = vmul.f32 %v802, 0.125
    %v807 = vmul.f32 %v803, 0.125
    %v808 = vadd.f32 %v796, %v804
    %v809 = vadd.f32 %v797, %v805
    %v810 = vadd.f32 %v798, %v806
    %v811 = vadd.f32 %v799, %v807
    %v812 = vmul.f32 %v784, %v35
    %v813 = vmul.f32 %v785, %v36
    %v814 = vmul.f32 %v786, %v37
    %v815 = vmul.f32 %v787, %v38
    %v816 = vadd.f32 %v808, %v812
    %v817 = vadd.f32 %v809, %v813
    %v818 = vadd.f32 %v810, %v814
    %v819 = vadd.f32 %v811, %v815
    %v820 = vsel %vm158, %v817, 0.0
    %v821 = vadd.f32 %v816, %v820
    %822 = vadd.xlane.f32.xlu0 %v821
    %v823 = vpop.xlane.xlu0 %822
    %v824 = vsel %vm158, %v819, 0.0
    %v825 = vadd.f32 %v818, %v824
    %826 = vadd.xlane.f32.xlu0 %v825
    %v827 = vpop.xlane.xlu0 %826
    %v828 = vlaneseq
    %v829 = vand.u32 %v828, 127
    %vm830 = vcmp.eq.s32.totalorder %v829, 0
    %vm831 = vcmp.eq.s32.totalorder %v829, 1
    %v832 = vstv %s775
    %v833 = vsel %vm831, %v832, 0.0
    %v834 = vsel %vm830, %v823, %v833
    %v835 = vsel %vm830, %v827, %v833
    %836 = vst [vmem:[%s4] sm:$0xff] %v834
    %837 = vst [vmem:[%s4 + $0x8] sm:$0xff] %v835
    // Predicated region
    $region22: #{nonshared_model_forward.1} parent=1 // pred_check
      _
    $region23: #{nonshared_model_forward.1} parent=1 // pred_check_branch
      %839 = sbr.rel (0) target = $region25
    $region24: #{nonshared_model_forward.1} parent=1 // pred_region
      _
    $region25: #{nonshared_model_forward.1} parent=1 // pred_fallthru
      _
    // Predicated region
    $region26: #{nonshared_model_forward.1} parent=1 // pred_check
      _
    $region27: #{nonshared_model_forward.1} parent=1 // pred_check_branch
      %841 = sbr.rel (0) target = $region29
    $region28: #{nonshared_model_forward.1} parent=1 // pred_region
      _
    $region29: #{nonshared_model_forward.1} parent=1 // pred_fallthru
      _
    %842 = vsyncpa [#allocation3], 1

</llo_original>
